<compile_context>
chip_gen: v5e
topology: v5e:2x2
jax: 0.10.0
libtpu: 0.0.40
codegen_flags: <defaults>
</compile_context>

<pallas_src>
import jax
import jax.numpy as jnp
from jax.experimental import pallas as pl
from jax.experimental.pallas import tpu as pltpu


# ----------------------------- helpers ------------------------------------- #

def _vmem_capacity_bytes():
    """Chip VMEM capacity; conservative 64 MiB (v7x) fallback if unavailable."""
    try:
        info = pltpu.get_tpu_info()
        cap = int(getattr(info, "vmem_capacity_bytes", 64 << 20))
        if cap <= 0:
            cap = 64 << 20
        return cap
    except Exception:
        return 64 << 20


def _pick_tiles(n, cin, cout, hw_pad, itemsize, budget_bytes):
    """Pick (batch_block, spatial_tile) so double-buffered blocks fit the budget."""
    def step_bytes(bb, tm):
        # double-buffered x block + double-buffered (largest) output block
        return 2 * bb * cin * tm * itemsize + 2 * bb * cout * tm * itemsize

    # Largest multiple of 128 that divides hw_pad and fits the budget.
    tm = 128
    t = 128
    while t <= hw_pad:
        if hw_pad % t == 0 and step_bytes(1, t) <= budget_bytes:
            tm = t
        t += 128

    # Then grow the batch block (divisor of n) to amortize per-step overhead.
    bb = 1
    for b in range(1, n + 1):
        if n % b == 0 and step_bytes(b, tm) <= budget_bytes:
            bb = b
    return bb, tm


# ----------------------------- kernels ------------------------------------- #

def _stats_kernel(x_ref, w_ref, sum_ref, sumsq_ref):
    """Per-step partial sum / sum-of-squares of y = W @ x over this tile."""
    w = w_ref[...]                                   # (Cout, Cin), input dtype
    s = jnp.zeros(sum_ref.shape, jnp.float32)
    ss = jnp.zeros(sumsq_ref.shape, jnp.float32)
    for b in range(x_ref.shape[0]):                  # small static batch block
        y = jnp.dot(w, x_ref[b], preferred_element_type=jnp.float32)  # (Cout, TM)
        s = s + jnp.sum(y, axis=-1, keepdims=True)
        ss = ss + jnp.sum(y * y, axis=-1, keepdims=True)
    sum_ref[...] = s
    sumsq_ref[...] = ss


def _stats_write_y_kernel(x_ref, w_ref, y_ref, sum_ref, sumsq_ref):
    """Same as _stats_kernel, but also caches the pre-BN y (avoids re-reading x)."""
    w = w_ref[...]
    s = jnp.zeros(sum_ref.shape, jnp.float32)
    ss = jnp.zeros(sumsq_ref.shape, jnp.float32)
    for b in range(x_ref.shape[0]):
        y = jnp.dot(w, x_ref[b], preferred_element_type=jnp.float32)
        y_ref[b] = y.astype(y_ref.dtype)
        s = s + jnp.sum(y, axis=-1, keepdims=True)
        ss = ss + jnp.sum(y * y, axis=-1, keepdims=True)
    sum_ref[...] = s
    sumsq_ref[...] = ss


def _apply_kernel(x_ref, w_ref, scale_ref, shift_ref, o_ref):
    """Recompute path: out = (W @ x) * scale + shift (f32 epilogue)."""
    w = w_ref[...]
    scale = scale_ref[...]                           # (Cout, 1) f32
    shift = shift_ref[...]                           # (Cout, 1) f32
    for b in range(x_ref.shape[0]):
        y = jnp.dot(w, x_ref[b], preferred_element_type=jnp.float32)  # (Cout, TM)
        o_ref[b] = (y * scale + shift).astype(o_ref.dtype)


def _affine_kernel(y_ref, scale_ref, shift_ref, o_ref):
    """Cached-y path: purely elementwise in-place y*scale + shift."""
    y = y_ref[...].astype(jnp.float32)               # (Bb, Cout, TM)
    o_ref[...] = (y * scale_ref[...] + shift_ref[...]).astype(o_ref.dtype)


# ----------------------------- wrapper ------------------------------------- #

def conv_bn_forward(x_nchw, weight, gamma, beta, eps=1e-5):
    """x_nchw: (N, Cin, H, W); weight: (Cout, Cin, 1, 1); gamma/beta: (Cout,)."""
    N, Cin, H, W = x_nchw.shape
    Cout = weight.shape[0]
    HW = H * W
    HW_pad = ((HW + 127) // 128) * 128

    cdt = x_nchw.dtype                              # MXU operand dtype (no upcast)
    x3 = x_nchw.reshape(N, Cin, HW)
    if HW_pad != HW:
        x3 = jnp.pad(x3, ((0, 0), (0, 0), (0, HW_pad - HW)))
    w2 = weight.reshape(Cout, Cin).astype(cdt)

    itemsize = jnp.dtype(cdt).itemsize
    vmem_cap = _vmem_capacity_bytes()
    budget = min(vmem_cap // 4, 24 << 20)           # ~16 MiB on v7x, 24 MiB on v5e/v6e
    Bb, TM = _pick_tiles(N, Cin, Cout, HW_pad, itemsize, budget)
    n_nb = N // Bb
    n_tiles = HW_pad // TM
    n_steps = n_nb * n_tiles

    step_bytes = (2 * Bb * Cin * TM * itemsize + 2 * Bb * Cout * TM * itemsize
                  + 2 * Cout * Cin * itemsize + 8 * Cout * 4)
    vmem_limit = int(max(16 << 20, min(vmem_cap * 3 // 4, step_bytes + (8 << 20))))

    cparams_p1 = pltpu.CompilerParams(
        dimension_semantics=("parallel", "parallel"), vmem_limit_bytes=vmem_limit)
    cparams_p2 = pltpu.CompilerParams(
        dimension_semantics=("parallel", "parallel"), vmem_limit_bytes=vmem_limit)

    x_spec = pl.BlockSpec((Bb, Cin, TM), lambda nb, t: (nb, 0, t))
    w_spec = pl.BlockSpec((Cout, Cin), lambda nb, t: (0, 0))
    vec_spec = pl.BlockSpec((Cout, 1), lambda nb, t: (0, 0))
    part_spec = pl.BlockSpec((None, Cout, 1),
                             lambda nb, t, _nt=n_tiles: (nb * _nt + t, 0, 0))
    y_spec = pl.BlockSpec((Bb, Cout, TM), lambda nb, t: (nb, 0, t))
    part_shape = jax.ShapeDtypeStruct((n_steps, Cout, 1), jnp.float32)

    # When the conv reduces channels, cache pre-BN y so pass 2 never re-reads x.
    use_cached_y = (2 * Cout <= Cin)

    # ---------------- pass 1: statistics (and optionally cached y) ----------
    if use_cached_y:
        y3, sums_p, sumsqs_p = pl.pallas_call(
            _stats_write_y_kernel,
            out_shape=(jax.ShapeDtypeStruct((N, Cout, HW_pad), cdt),
                       part_shape, part_shape),
            grid_spec=pltpu.PrefetchScalarGridSpec(
                num_scalar_prefetch=0,
                grid=(n_nb, n_tiles),
                in_specs=[x_spec, w_spec],
                out_specs=(y_spec, part_spec, part_spec),
            ),
            compiler_params=cparams_p1,
        )(x3, w2)
    else:
        sums_p, sumsqs_p = pl.pallas_call(
            _stats_kernel,
            out_shape=(part_shape, part_shape),
            grid_spec=pltpu.PrefetchScalarGridSpec(
                num_scalar_prefetch=0,
                grid=(n_nb, n_tiles),
                in_specs=[x_spec, w_spec],
                out_specs=(part_spec, part_spec),
            ),
            compiler_params=cparams_p1,
        )(x3, w2)

    # ---------------- fold BN stats into per-channel scale / shift ----------
    count = jnp.float32(N * HW)                     # true count (padding excluded)
    sums = jnp.sum(sums_p, axis=0)                  # (Cout, 1)
    sumsqs = jnp.sum(sumsqs_p, axis=0)              # (Cout, 1)
    mean = sums / count
    var = jnp.maximum(sumsqs / count - mean * mean, 0.0)   # biased variance
    inv_std = jax.lax.rsqrt(var + jnp.float32(eps))
    scale = gamma.reshape(Cout, 1).astype(jnp.float32) * inv_std
    shift = beta.reshape(Cout, 1).astype(jnp.float32) - mean * scale

    # ---------------- pass 2: normalize ------------------------------------
    if use_cached_y:
        out3 = pl.pallas_call(
            _affine_kernel,
            out_shape=jax.ShapeDtypeStruct((N, Cout, HW_pad), cdt),
            grid_spec=pltpu.PrefetchScalarGridSpec(
                num_scalar_prefetch=0,
                grid=(n_nb, n_tiles),
                in_specs=[y_spec, vec_spec, vec_spec],
                out_specs=y_spec,
            ),
            input_output_aliases={0: 0},            # in-place over cached y
            compiler_params=cparams_p2,
        )(y3, scale, shift)
    else:
        out3 = pl.pallas_call(
            _apply_kernel,
            out_shape=jax.ShapeDtypeStruct((N, Cout, HW_pad), cdt),
            grid_spec=pltpu.PrefetchScalarGridSpec(
                num_scalar_prefetch=0,
                grid=(n_nb, n_tiles),
                in_specs=[x_spec, w_spec, vec_spec, vec_spec],
                out_specs=y_spec,
            ),
            compiler_params=cparams_p2,
        )(x3, w2, scale, shift)

    if HW_pad != HW:
        out3 = out3[:, :, :HW]
    return out3.reshape(N, Cout, H, W)


# ----------------------------- test harness -------------------------------- #

def _reference(x, weight, gamma, beta, eps=1e-5):
    Cout = weight.shape[0]
    w2 = weight.reshape(Cout, -1)
    y = jnp.einsum('oc,nchw->nohw', w2, x)
    mu = jnp.mean(y, axis=(0, 2, 3), keepdims=True)
    var = jnp.mean((y - mu) ** 2, axis=(0, 2, 3), keepdims=True)
    g = gamma.reshape(1, Cout, 1, 1)
    b = beta.reshape(1, Cout, 1, 1)
    return (y - mu) * jax.lax.rsqrt(var + eps) * g + b


if __name__ == "__main__":
    key = jax.random.PRNGKey(0)

    def run_case(k, N, Cin, Cout, H, W, nontrivial_affine):
        k_x, k_w, k_g, k_b = jax.random.split(k, 4)
        x = jax.random.normal(k_x, (N, Cin, H, W), dtype=jnp.float32)
        bound = 1.0 / (Cin ** 0.5)
        weight = jax.random.uniform(k_w, (Cout, Cin, 1, 1), dtype=jnp.float32,
                                    minval=-bound, maxval=bound)
        if nontrivial_affine:
            gamma = jax.random.uniform(k_g, (Cout,), dtype=jnp.float32,
                                       minval=0.5, maxval=1.5)
            beta = 0.1 * jax.random.normal(k_b, (Cout,), dtype=jnp.float32)
        else:
            gamma = jnp.ones((Cout,), dtype=jnp.float32)   # BatchNorm2d defaults
            beta = jnp.zeros((Cout,), dtype=jnp.float32)
        out = jax.jit(conv_bn_forward)(x, weight, gamma, beta)
        jax.block_until_ready(out)
        ref = _reference(x, weight, gamma, beta)
        err = float(jnp.max(jnp.abs(out - ref)))
        assert err < 1e-4, f"max abs err {err}"

    k1, k2 = jax.random.split(key)
    # Case A: channel-expanding conv -> recompute path (module-default shapes).
    run_case(k1, N=2, Cin=4, Cout=8, H=16, W=16, nontrivial_affine=False)
    # Case B: channel-reducing conv + HW not a multiple of 128 -> cached-y path
    # with spatial zero-padding (196 -> 256) and in-place affine pass.
    run_case(k2, N=2, Cin=8, Cout=4, H=14, W=14, nontrivial_affine=True)

    print("KERNEL_OK")
</pallas_src>

<mosaic_0001>
module attributes {stable_mosaic.version = 11 : i64} {
  func.func @_stats_kernel(%arg0: i32, %arg1: i32, %arg2: memref<2x4x256xf32, #tpu.memory_space<vmem>>, %arg3: memref<8x4xf32, #tpu.memory_space<vmem>>, %arg4: memref<1x8x1xf32, #tpu.memory_space<vmem>>, %arg5: memref<1x8x1xf32, #tpu.memory_space<vmem>>) attributes {dimension_semantics = [#tpu.dimension_semantics<parallel>, #tpu.dimension_semantics<parallel>], iteration_bounds = array<i64: 1, 1>, scalar_prefetch = 0 : i64, scratch_operands = 0 : i64, tpu.core_type = #tpu.core_type<tc>, window_params = [{transform_indices = @transform_0, window_bounds = array<i64: 2, 4, 256>}, {pipeline_mode = #tpu.pipeline_mode<synchronous>, transform_indices = @transform_1, window_bounds = array<i64: 8, 4>}, {transform_indices = @transform_2, window_bounds = array<i64: 1, 8, 1>}, {transform_indices = @transform_3, window_bounds = array<i64: 1, 8, 1>}]} {
    %c0 = arith.constant 0 : index
    %c0_0 = arith.constant 0 : index
    %0 = vector.load %arg3[%c0, %c0_0] : memref<8x4xf32, #tpu.memory_space<vmem>>, vector<8x4xf32>
    %cst = arith.constant 0.000000e+00 : f32
    %1 = vector.broadcast %cst : f32 to vector<8x1xf32>
    %cst_1 = arith.constant 0.000000e+00 : f32
    %2 = vector.broadcast %cst_1 : f32 to vector<8x1xf32>
    %c0_2 = arith.constant 0 : index
    %c0_3 = arith.constant 0 : index
    %c0_4 = arith.constant 0 : index
    %3 = vector.load %arg2[%c0_2, %c0_3, %c0_4] : memref<2x4x256xf32, #tpu.memory_space<vmem>>, vector<1x4x256xf32>
    %4 = vector.shape_cast %3 : vector<1x4x256xf32> to vector<4x256xf32>
    %cst_5 = arith.constant dense<0.000000e+00> : vector<8x256xf32>
    %5 = tpu.matmul %0, %4, %cst_5 {dimension_numbers = #tpu.dot_dimension_numbers<[1], [0], [0], [1], [0, 0, 1, 1], [], []>} : vector<8x4xf32>, vector<4x256xf32>, vector<8x256xf32> -> vector<8x256xf32>
    %cst_6 = arith.constant dense<0.000000e+00> : vector<8xf32>
    %6 = vector.multi_reduction <add>, %5, %cst_6 [1] : vector<8x256xf32> to vector<8xf32>
    %7 = vector.shape_cast %6 : vector<8xf32> to vector<8x1xf32>
    %8 = arith.addf %1, %7 : vector<8x1xf32>
    %9 = arith.mulf %5, %5 : vector<8x256xf32>
    %cst_7 = arith.constant dense<0.000000e+00> : vector<8xf32>
    %10 = vector.multi_reduction <add>, %9, %cst_7 [1] : vector<8x256xf32> to vector<8xf32>
    %11 = vector.shape_cast %10 : vector<8xf32> to vector<8x1xf32>
    %12 = arith.addf %2, %11 : vector<8x1xf32>
    %c1 = arith.constant 1 : index
    %c0_8 = arith.constant 0 : index
    %c0_9 = arith.constant 0 : index
    %13 = vector.load %arg2[%c1, %c0_8, %c0_9] : memref<2x4x256xf32, #tpu.memory_space<vmem>>, vector<1x4x256xf32>
    %14 = vector.shape_cast %13 : vector<1x4x256xf32> to vector<4x256xf32>
    %cst_10 = arith.constant dense<0.000000e+00> : vector<8x256xf32>
    %15 = tpu.matmul %0, %14, %cst_10 {dimension_numbers = #tpu.dot_dimension_numbers<[1], [0], [0], [1], [0, 0, 1, 1], [], []>} : vector<8x4xf32>, vector<4x256xf32>, vector<8x256xf32> -> vector<8x256xf32>
    %cst_11 = arith.constant dense<0.000000e+00> : vector<8xf32>
    %16 = vector.multi_reduction <add>, %15, %cst_11 [1] : vector<8x256xf32> to vector<8xf32>
    %17 = vector.shape_cast %16 : vector<8xf32> to vector<8x1xf32>
    %18 = arith.addf %8, %17 : vector<8x1xf32>
    %19 = arith.mulf %15, %15 : vector<8x256xf32>
    %cst_12 = arith.constant dense<0.000000e+00> : vector<8xf32>
    %20 = vector.multi_reduction <add>, %19, %cst_12 [1] : vector<8x256xf32> to vector<8xf32>
    %21 = vector.shape_cast %20 : vector<8xf32> to vector<8x1xf32>
    %22 = arith.addf %12, %21 : vector<8x1xf32>
    %c0_13 = arith.constant 0 : index
    %c0_14 = arith.constant 0 : index
    %c0_15 = arith.constant 0 : index
    %23 = vector.load %arg4[%c0_13, %c0_14, %c0_15] : memref<1x8x1xf32, #tpu.memory_space<vmem>>, vector<1x8x1xf32>
    %24 = vector.shape_cast %23 : vector<1x8x1xf32> to vector<8x1xf32>
    %25 = vector.shape_cast %18 : vector<8x1xf32> to vector<1x8x1xf32>
    tpu.vector_store %arg4[%c0_13, %c0_14, %c0_15], %25 {strides = array<i32>} : memref<1x8x1xf32, #tpu.memory_space<vmem>>, vector<1x8x1xf32>,
    %c0_16 = arith.constant 0 : index
    %c0_17 = arith.constant 0 : index
    %c0_18 = arith.constant 0 : index
    %26 = vector.load %arg5[%c0_16, %c0_17, %c0_18] : memref<1x8x1xf32, #tpu.memory_space<vmem>>, vector<1x8x1xf32>
    %27 = vector.shape_cast %26 : vector<1x8x1xf32> to vector<8x1xf32>
    %28 = vector.shape_cast %22 : vector<8x1xf32> to vector<1x8x1xf32>
    tpu.vector_store %arg5[%c0_16, %c0_17, %c0_18], %28 {strides = array<i32>} : memref<1x8x1xf32, #tpu.memory_space<vmem>>, vector<1x8x1xf32>,
    return
  }
  func.func @transform_0(%arg0: i32, %arg1: i32) -> (i32, i32, i32) {
    %c0_i32 = arith.constant 0 : i32
    %c0_i32_0 = arith.constant 0 : i32
    return %arg0, %c0_i32, %arg1 : i32, i32, i32
  }
  func.func @transform_1(%arg0: i32, %arg1: i32) -> (i32, i32) {
    %c0_i32 = arith.constant 0 : i32
    %c0_i32_0 = arith.constant 0 : i32
    %c0_i32_1 = arith.constant 0 : i32
    return %c0_i32, %c0_i32_0 : i32, i32
  }
  func.func @transform_2(%arg0: i32, %arg1: i32) -> (i32, i32, i32) {
    %c1_i32 = arith.constant 1 : i32
    %0 = arith.muli %arg0, %c1_i32 : i32
    %1 = arith.addi %0, %arg1 : i32
    %c0_i32 = arith.constant 0 : i32
    %c0_i32_0 = arith.constant 0 : i32
    %c0_i32_1 = arith.constant 0 : i32
    return %1, %c0_i32, %c0_i32_0 : i32, i32, i32
  }
  func.func @transform_3(%arg0: i32, %arg1: i32) -> (i32, i32, i32) {
    %c1_i32 = arith.constant 1 : i32
    %0 = arith.muli %arg0, %c1_i32 : i32
    %1 = arith.addi %0, %arg1 : i32
    %c0_i32 = arith.constant 0 : i32
    %c0_i32_0 = arith.constant 0 : i32
    %c0_i32_1 = arith.constant 0 : i32
    return %1, %c0_i32, %c0_i32_0 : i32, i32, i32
  }
}

module attributes {stable_mosaic.version = 11 : i64} {
  func.func @_apply_kernel(%arg0: i32, %arg1: i32, %arg2: memref<2x4x256xf32, #tpu.memory_space<vmem>>, %arg3: memref<8x4xf32, #tpu.memory_space<vmem>>, %arg4: memref<8x1xf32, #tpu.memory_space<vmem>>, %arg5: memref<8x1xf32, #tpu.memory_space<vmem>>, %arg6: memref<2x8x256xf32, #tpu.memory_space<vmem>>) attributes {dimension_semantics = [#tpu.dimension_semantics<parallel>, #tpu.dimension_semantics<parallel>], iteration_bounds = array<i64: 1, 1>, scalar_prefetch = 0 : i64, scratch_operands = 0 : i64, tpu.core_type = #tpu.core_type<tc>, window_params = [{transform_indices = @transform_0, window_bounds = array<i64: 2, 4, 256>}, {pipeline_mode = #tpu.pipeline_mode<synchronous>, transform_indices = @transform_1, window_bounds = array<i64: 8, 4>}, {pipeline_mode = #tpu.pipeline_mode<synchronous>, transform_indices = @transform_2, window_bounds = array<i64: 8, 1>}, {pipeline_mode = #tpu.pipeline_mode<synchronous>, transform_indices = @transform_3, window_bounds = array<i64: 8, 1>}, {transform_indices = @transform_4, window_bounds = array<i64: 2, 8, 256>}]} {
    %c0 = arith.constant 0 : index
    %c0_0 = arith.constant 0 : index
    %0 = vector.load %arg3[%c0, %c0_0] : memref<8x4xf32, #tpu.memory_space<vmem>>, vector<8x4xf32>
    %c0_1 = arith.constant 0 : index
    %c0_2 = arith.constant 0 : index
    %1 = vector.load %arg4[%c0_1, %c0_2] : memref<8x1xf32, #tpu.memory_space<vmem>>, vector<8x1xf32>
    %c0_3 = arith.constant 0 : index
    %c0_4 = arith.constant 0 : index
    %2 = vector.load %arg5[%c0_3, %c0_4] : memref<8x1xf32, #tpu.memory_space<vmem>>, vector<8x1xf32>
    %c0_5 = arith.constant 0 : index
    %c0_6 = arith.constant 0 : index
    %c0_7 = arith.constant 0 : index
    %3 = vector.load %arg2[%c0_5, %c0_6, %c0_7] : memref<2x4x256xf32, #tpu.memory_space<vmem>>, vector<1x4x256xf32>
    %4 = vector.shape_cast %3 : vector<1x4x256xf32> to vector<4x256xf32>
    %cst = arith.constant dense<0.000000e+00> : vector<8x256xf32>
    %5 = tpu.matmul %0, %4, %cst {dimension_numbers = #tpu.dot_dimension_numbers<[1], [0], [0], [1], [0, 0, 1, 1], [], []>} : vector<8x4xf32>, vector<4x256xf32>, vector<8x256xf32> -> vector<8x256xf32>
    %6 = vector.broadcast %1 : vector<8x1xf32> to vector<8x256xf32>
    %7 = arith.mulf %5, %6 : vector<8x256xf32>
    %8 = vector.broadcast %2 : vector<8x1xf32> to vector<8x256xf32>
    %9 = arith.addf %7, %8 : vector<8x256xf32>
    %c0_8 = arith.constant 0 : index
    %c0_9 = arith.constant 0 : index
    %c0_10 = arith.constant 0 : index
    %10 = vector.load %arg6[%c0_8, %c0_9, %c0_10] : memref<2x8x256xf32, #tpu.memory_space<vmem>>, vector<1x8x256xf32>
    %11 = vector.shape_cast %10 : vector<1x8x256xf32> to vector<8x256xf32>
    %12 = vector.shape_cast %9 : vector<8x256xf32> to vector<1x8x256xf32>
    tpu.vector_store %arg6[%c0_8, %c0_9, %c0_10], %12 {strides = array<i32>} : memref<2x8x256xf32, #tpu.memory_space<vmem>>, vector<1x8x256xf32>,
    %c1 = arith.constant 1 : index
    %c0_11 = arith.constant 0 : index
    %c0_12 = arith.constant 0 : index
    %13 = vector.load %arg2[%c1, %c0_11, %c0_12] : memref<2x4x256xf32, #tpu.memory_space<vmem>>, vector<1x4x256xf32>
    %14 = vector.shape_cast %13 : vector<1x4x256xf32> to vector<4x256xf32>
    %cst_13 = arith.constant dense<0.000000e+00> : vector<8x256xf32>
    %15 = tpu.matmul %0, %14, %cst_13 {dimension_numbers = #tpu.dot_dimension_numbers<[1], [0], [0], [1], [0, 0, 1, 1], [], []>} : vector<8x4xf32>, vector<4x256xf32>, vector<8x256xf32> -> vector<8x256xf32>
    %16 = vector.broadcast %1 : vector<8x1xf32> to vector<8x256xf32>
    %17 = arith.mulf %15, %16 : vector<8x256xf32>
    %18 = vector.broadcast %2 : vector<8x1xf32> to vector<8x256xf32>
    %19 = arith.addf %17, %18 : vector<8x256xf32>
    %c1_14 = arith.constant 1 : index
    %c0_15 = arith.constant 0 : index
    %c0_16 = arith.constant 0 : index
    %20 = vector.load %arg6[%c1_14, %c0_15, %c0_16] : memref<2x8x256xf32, #tpu.memory_space<vmem>>, vector<1x8x256xf32>
    %21 = vector.shape_cast %20 : vector<1x8x256xf32> to vector<8x256xf32>
    %22 = vector.shape_cast %19 : vector<8x256xf32> to vector<1x8x256xf32>
    tpu.vector_store %arg6[%c1_14, %c0_15, %c0_16], %22 {strides = array<i32>} : memref<2x8x256xf32, #tpu.memory_space<vmem>>, vector<1x8x256xf32>,
    return
  }
  func.func @transform_0(%arg0: i32, %arg1: i32) -> (i32, i32, i32) {
    %c0_i32 = arith.constant 0 : i32
    %c0_i32_0 = arith.constant 0 : i32
    return %arg0, %c0_i32, %arg1 : i32, i32, i32
  }
  func.func @transform_1(%arg0: i32, %arg1: i32) -> (i32, i32) {
    %c0_i32 = arith.constant 0 : i32
    %c0_i32_0 = arith.constant 0 : i32
    %c0_i32_1 = arith.constant 0 : i32
    return %c0_i32, %c0_i32_0 : i32, i32
  }
  func.func @transform_2(%arg0: i32, %arg1: i32) -> (i32, i32) {
    %c0_i32 = arith.constant 0 : i32
    %c0_i32_0 = arith.constant 0 : i32
    %c0_i32_1 = arith.constant 0 : i32
    return %c0_i32, %c0_i32_0 : i32, i32
  }
  func.func @transform_3(%arg0: i32, %arg1: i32) -> (i32, i32) {
    %c0_i32 = arith.constant 0 : i32
    %c0_i32_0 = arith.constant 0 : i32
    %c0_i32_1 = arith.constant 0 : i32
    return %c0_i32, %c0_i32_0 : i32, i32
  }
  func.func @transform_4(%arg0: i32, %arg1: i32) -> (i32, i32, i32) {
    %c0_i32 = arith.constant 0 : i32
    %c0_i32_0 = arith.constant 0 : i32
    return %arg0, %c0_i32, %arg1 : i32, i32, i32
  }
}

</mosaic_0001>

<llo_original>
// kernel: conv_bn_forward.2
$region0: #{conv_bn_forward.2}
  #allocation0 [shape = 'u32[]', space=smem, size = 0x4, offset = 0x4, fixed_abs, tag = 'smem constant byte address 0x4 - core index']
  #allocation1 [shape = 'u32[72,128]{1,0:T(1,128)}', space=vmem, size = 0x9000, scoped, tag = 'internal scratch']
  %s0 = inlined_call_operand.vmem [shape: f32[2,4,256], index: 0, kind: input, shape index: {}]
  %s1 = inlined_call_operand.vmem [shape: f32[8,4], index: 1, kind: input, shape index: {}]
  %s2 = inlined_call_operand.vmem [shape: f32[1,8,1], index: 2, kind: output, shape index: {0}]
  %s3 = inlined_call_operand.vmem [shape: f32[1,8,1], index: 3, kind: output, shape index: {1}]
  %4 = xla_tuple %s2, %s3
  %s5 = sld [smem:[#allocation0]]
  $region26: #{conv_bn_forward.2} parent=0
    _
  %s7 = ssub.s32 1, %s5
  %s8 = scalar_select 0, %s7, %s5
  // Predicated region
  $region2: #{conv_bn_forward.2} parent=0 // pred_check
    _
  $region3: #{conv_bn_forward.2} parent=0 // pred_check_branch
    %10 = sbr.rel (0) target = $region5
  $region4: #{conv_bn_forward.2} parent=0 // pred_region
    _
  $region5: #{conv_bn_forward.2} parent=0 // pred_fallthru
    _
  // Predicated region
  $region6: #{conv_bn_forward.2} parent=0 // pred_check
    _
  $region7: #{conv_bn_forward.2} parent=0 // pred_check_branch
    %12 = sbr.rel (0) target = $region9
  $region8: #{conv_bn_forward.2} parent=0 // pred_region
    _
  $region9: #{conv_bn_forward.2} parent=0 // pred_fallthru
    _
  %s13 = sadd.s32 0, 0
  %p14 = scmp.lt.s32.totalorder %s13, 0
  %s15 = scalar_select %p14, %s13, 0
  %s16 = smul.addr %s15, 8
  %s17 = scalar_lea.vmem %s2, %s16
  %s18 = sadd.s32 0, 0
  %p19 = scmp.lt.s32.totalorder %s18, 0
  %s20 = scalar_select %p19, %s18, 0
  %s21 = smul.addr %s20, 8
  %s22 = scalar_lea.vmem %s3, %s21
  %s23 = sadd.s32 0, 0
  %p24 = scmp.lt.s32.totalorder %s23, 0
  %s25 = scalar_select %p24, %s23, 0
  %s26 = smul.addr %s25, 8
  %s27 = scalar_lea.vmem %s2, %s26
  %s28 = sadd.s32 0, 0
  %s29 = sadd.s32 0, 0
  %p30 = scmp.lt.s32.totalorder %s29, 0
  %s31 = scalar_select %p30, %s29, 0
  %s32 = smul.addr %s31, 8
  %s33 = scalar_lea.vmem %s3, %s32
  %s34 = sadd.s32 0, 0
  %v35 = vld [vmem:[%s1] sm:$0xff]
  %v36 = vld [vmem:[%s0] sm:$0xff]
  %38 = vst [vmem:[#allocation1] ss:$2 sm:$0xff] %v36
  %v39 = vld.sshfl [vmem:[#allocation1] sm:$0xff pattern:$0x75316420]
  %v40 = vld.sshfl [vmem:[#allocation1 + $0x8] sm:$0xff pattern:$0x75316420]
  %vm41 = vcmask 31744
  %v43 = vsel %vm41, %v35, 0
  %vm45 = vcmask 1043456
  %v46 = vsel %vm45, %v39, 0
  %v48 = vsel %vm45, %v40, 0
  %50 = vmatpush.msra.mxu0 0.0
  %51 = vmatpush.msra.mxu0 0.0
  %52 = vmatpush.msra.mxu0 0.0
  %53 = vmatpush.msra.mxu0 0.0
  %54 = vmatpush.msra.mxu0 0.0
  %55 = vmatpush.msra.mxu0 0.0
  %56 = vmatpush.msra.mxu0 0.0
  %57 = vmatpush.msra.mxu0 0.0
  %58 = vmatpush.msra.mxu0 0.0
  %59 = vmatpush.msra.mxu0 0.0
  %60 = vmatpush.msra.mxu0 0.0
  %61 = vmatpush.msra.mxu0 0.0
  %62 = vmatpush.msra.mxu0 0.0
  %63 = vmatpush.msra.mxu0 0.0
  %64 = vmatpush.msra.mxu0 0.0
  %65 = vmatpush.msra.mxu0 %v46
  %66 = vmatmul.f32.gmra.mxu0 %v43
  %v67 = vpop.f32.mrf.mxu0
  %v68 = vadd.f32 0.0, %v67
  %69 = vdwg.mxu0
  %70 = vmatpush.msra.mxu0 0.0
  %71 = vmatpush.msra.mxu0 0.0
  %72 = vmatpush.msra.mxu0 0.0
  %73 = vmatpush.msra.mxu0 0.0
  %74 = vmatpush.msra.mxu0 0.0
  %75 = vmatpush.msra.mxu0 0.0
  %76 = vmatpush.msra.mxu0 0.0
  %77 = vmatpush.msra.mxu0 0.0
  %78 = vmatpush.msra.mxu0 0.0
  %79 = vmatpush.msra.mxu0 0.0
  %80 = vmatpush.msra.mxu0 0.0
  %81 = vmatpush.msra.mxu0 0.0
  %82 = vmatpush.msra.mxu0 0.0
  %83 = vmatpush.msra.mxu0 0.0
  %84 = vmatpush.msra.mxu0 0.0
  %85 = vmatpush.msra.mxu0 %v48
  %86 = vmatmul.f32.gmra.mxu0 %v43
  %v87 = vpop.f32.mrf.mxu0
  %v88 = vadd.f32 0.0, %v87
  %89 = vdwg.mxu0
  %v90 = vadd.f32 %v68, %v88
  %91 = vadd.xlane.f32.xlu0 %v90
  %v92 = vpop.xlane.xlu0 %91
  %v93 = vadd.f32 %v92, 0.0
  %v94 = vmul.f32 %v68, %v68
  %v95 = vmul.f32 %v88, %v88
  %v96 = vadd.f32 %v94, %v95
  %97 = vadd.xlane.f32.xlu0 %v96
  %v98 = vpop.xlane.xlu0 %97
  %v99 = vadd.f32 %v98, 0.0
  %s100 = scalar_lea.vmem %s0, 8
  %v101 = vld [vmem:[%s100] sm:$0xff]
  %103 = vst [vmem:[#allocation1] ss:$2 sm:$0xff] %v101
  %v104 = vld.sshfl [vmem:[#allocation1] sm:$0xff pattern:$0x75316420]
  %v105 = vld.sshfl [vmem:[#allocation1 + $0x8] sm:$0xff pattern:$0x75316420]
  %v106 = vsel %vm45, %v104, 0
  %v108 = vsel %vm45, %v105, 0
  %110 = vmatpush.msra.mxu0 0.0
  %111 = vmatpush.msra.mxu0 0.0
  %112 = vmatpush.msra.mxu0 0.0
  %113 = vmatpush.msra.mxu0 0.0
  %114 = vmatpush.msra.mxu0 0.0
  %115 = vmatpush.msra.mxu0 0.0
  %116 = vmatpush.msra.mxu0 0.0
  %117 = vmatpush.msra.mxu0 0.0
  %118 = vmatpush.msra.mxu0 0.0
  %119 = vmatpush.msra.mxu0 0.0
  %120 = vmatpush.msra.mxu0 0.0
  %121 = vmatpush.msra.mxu0 0.0
  %122 = vmatpush.msra.mxu0 0.0
  %123 = vmatpush.msra.mxu0 0.0
  %124 = vmatpush.msra.mxu0 0.0
  %125 = vmatpush.msra.mxu0 %v106
  %126 = vmatmul.f32.gmra.mxu0 %v43
  %v127 = vpop.f32.mrf.mxu0
  %v128 = vadd.f32 0.0, %v127
  %129 = vdwg.mxu0
  %130 = vmatpush.msra.mxu0 0.0
  %131 = vmatpush.msra.mxu0 0.0
  %132 = vmatpush.msra.mxu0 0.0
  %133 = vmatpush.msra.mxu0 0.0
  %134 = vmatpush.msra.mxu0 0.0
  %135 = vmatpush.msra.mxu0 0.0
  %136 = vmatpush.msra.mxu0 0.0
  %137 = vmatpush.msra.mxu0 0.0
  %138 = vmatpush.msra.mxu0 0.0
  %139 = vmatpush.msra.mxu0 0.0
  %140 = vmatpush.msra.mxu0 0.0
  %141 = vmatpush.msra.mxu0 0.0
  %142 = vmatpush.msra.mxu0 0.0
  %143 = vmatpush.msra.mxu0 0.0
  %144 = vmatpush.msra.mxu0 0.0
  %145 = vmatpush.msra.mxu0 %v108
  %146 = vmatmul.f32.gmra.mxu0 %v43
  %v147 = vpop.f32.mrf.mxu0
  %v148 = vadd.f32 0.0, %v147
  %149 = vdwg.mxu0
  %v150 = vadd.f32 %v128, %v148
  %151 = vadd.xlane.f32.xlu0 %v150
  %v152 = vpop.xlane.xlu0 %151
  %v153 = vadd.f32 %v93, %v152
  %v154 = vmul.f32 %v128, %v128
  %v155 = vmul.f32 %v148, %v148
  %v156 = vadd.f32 %v154, %v155
  %157 = vadd.xlane.f32.xlu0 %v156
  %v158 = vpop.xlane.xlu0 %157
  %v159 = vadd.f32 %v99, %v158
  %vm160 = vcmask 7168
  %161 = vst.msk [vmem:[%s27] sm:$0xff] %vm160, %v153
  %162 = vst.msk [vmem:[%s33] sm:$0xff] %vm160, %v159
  %s163 = sadd.s32 0, 0
  %p164 = scmp.lt.s32.totalorder %s163, 0
  %s165 = scalar_select %p164, %s163, 0
  %s166 = smul.addr %s165, 8
  %s167 = scalar_lea.vmem %s2, %s166
  %s168 = sadd.s32 0, 0
  %p169 = scmp.lt.s32.totalorder %s168, 0
  %s170 = scalar_select %p169, %s168, 0
  %s171 = smul.addr %s170, 8
  %s172 = scalar_lea.vmem %s3, %s171
  // Predicated region
  $region10: #{conv_bn_forward.2} parent=0 // pred_check
    _
  $region11: #{conv_bn_forward.2} parent=0 // pred_check_branch
    %174 = sbr.rel (0) target = $region13
  $region12: #{conv_bn_forward.2} parent=0 // pred_region
    %s175 = sadd.s32 0, 0
  $region13: #{conv_bn_forward.2} parent=0 // pred_fallthru
    _
  // Predicated region
  $region14: #{conv_bn_forward.2} parent=0 // pred_check
    _
  $region15: #{conv_bn_forward.2} parent=0 // pred_check_branch
    %177 = sbr.rel (0) target = $region17
  $region16: #{conv_bn_forward.2} parent=0 // pred_region
    %s178 = sadd.s32 0, 0
  $region17: #{conv_bn_forward.2} parent=0 // pred_fallthru
    _
  // Predicated region
  $region18: #{conv_bn_forward.2} parent=0 // pred_check
    _
  $region19: #{conv_bn_forward.2} parent=0 // pred_check_branch
    %180 = sbr.rel (0) target = $region21
  $region20: #{conv_bn_forward.2} parent=0 // pred_region
    %s181 = sadd.s32 0, 0
    %p182 = scmp.lt.s32.totalorder %s181, 0
    %s183 = scalar_select %p182, %s181, 0
    %s184 = smul.addr %s183, 8
    %s185 = scalar_lea.vmem %s2, %s184
  $region21: #{conv_bn_forward.2} parent=0 // pred_fallthru
    _
  // Predicated region
  $region22: #{conv_bn_forward.2} parent=0 // pred_check
    _
  $region23: #{conv_bn_forward.2} parent=0 // pred_check_branch
    %187 = sbr.rel (0) target = $region25
  $region24: #{conv_bn_forward.2} parent=0 // pred_region
    %s188 = sadd.s32 0, 0
    %p189 = scmp.lt.s32.totalorder %s188, 0
    %s190 = scalar_select %p189, %s188, 0
    %s191 = smul.addr %s190, 8
    %s192 = scalar_lea.vmem %s3, %s191
  $region25: #{conv_bn_forward.2} parent=0 // pred_fallthru
    _

// kernel: conv_bn_forward.3
$region0: #{conv_bn_forward.3}
  #allocation0 [shape = 'u32[]', space=smem, size = 0x4, offset = 0x4, fixed_abs, tag = 'smem constant byte address 0x4 - core index']
  #allocation1 [shape = 'u32[72,128]{1,0:T(1,128)}', space=vmem, size = 0x9000, scoped, tag = 'internal scratch']
  %s0 = inlined_call_operand.vmem [shape: f32[2,4,256], index: 0, kind: input, shape index: {}]
  %s1 = inlined_call_operand.vmem [shape: f32[8,4], index: 1, kind: input, shape index: {}]
  %s2 = inlined_call_operand.vmem [shape: f32[8,1], index: 2, kind: input, shape index: {}]
  %s3 = inlined_call_operand.vmem [shape: f32[8,1], index: 3, kind: input, shape index: {}]
  %s4 = inlined_call_operand.vmem [shape: f32[2,8,256], index: 4, kind: output, shape index: {}]
  %s5 = sld [smem:[#allocation0]]
  $region26: #{conv_bn_forward.3} parent=0
    _
  %s7 = ssub.s32 1, %s5
  %s8 = scalar_select 0, %s7, %s5
  // Predicated region
  $region2: #{conv_bn_forward.3} parent=0 // pred_check
    _
  $region3: #{conv_bn_forward.3} parent=0 // pred_check_branch
    %10 = sbr.rel (0) target = $region5
  $region4: #{conv_bn_forward.3} parent=0 // pred_region
    _
  $region5: #{conv_bn_forward.3} parent=0 // pred_fallthru
    _
  // Predicated region
  $region6: #{conv_bn_forward.3} parent=0 // pred_check
    _
  $region7: #{conv_bn_forward.3} parent=0 // pred_check_branch
    %12 = sbr.rel (0) target = $region9
  $region8: #{conv_bn_forward.3} parent=0 // pred_region
    _
  $region9: #{conv_bn_forward.3} parent=0 // pred_fallthru
    _
  // Predicated region
  $region10: #{conv_bn_forward.3} parent=0 // pred_check
    _
  $region11: #{conv_bn_forward.3} parent=0 // pred_check_branch
    %14 = sbr.rel (0) target = $region13
  $region12: #{conv_bn_forward.3} parent=0 // pred_region
    _
  $region13: #{conv_bn_forward.3} parent=0 // pred_fallthru
    _
  // Predicated region
  $region14: #{conv_bn_forward.3} parent=0 // pred_check
    _
  $region15: #{conv_bn_forward.3} parent=0 // pred_check_branch
    %16 = sbr.rel (0) target = $region17
  $region16: #{conv_bn_forward.3} parent=0 // pred_region
    _
  $region17: #{conv_bn_forward.3} parent=0 // pred_fallthru
    _
  %v17 = vld [vmem:[%s1] sm:$0xff]
  %v18 = vld [vmem:[%s2] sm:$0xff]
  %v19 = vld [vmem:[%s3] sm:$0xff]
  %v20 = vld [vmem:[%s0] sm:$0xff]
  %22 = vst [vmem:[#allocation1] ss:$2 sm:$0xff] %v20
  %v23 = vld.sshfl [vmem:[#allocation1] sm:$0xff pattern:$0x75316420]
  %v24 = vld.sshfl [vmem:[#allocation1 + $0x8] sm:$0xff pattern:$0x75316420]
  %vm25 = vcmask 31744
  %v27 = vsel %vm25, %v17, 0
  %vm29 = vcmask 1043456
  %v30 = vsel %vm29, %v23, 0
  %v32 = vsel %vm29, %v24, 0
  %34 = vmatpush.msra.mxu0 0.0
  %35 = vmatpush.msra.mxu0 0.0
  %36 = vmatpush.msra.mxu0 0.0
  %37 = vmatpush.msra.mxu0 0.0
  %38 = vmatpush.msra.mxu0 0.0
  %39 = vmatpush.msra.mxu0 0.0
  %40 = vmatpush.msra.mxu0 0.0
  %41 = vmatpush.msra.mxu0 0.0
  %42 = vmatpush.msra.mxu0 0.0
  %43 = vmatpush.msra.mxu0 0.0
  %44 = vmatpush.msra.mxu0 0.0
  %45 = vmatpush.msra.mxu0 0.0
  %46 = vmatpush.msra.mxu0 0.0
  %47 = vmatpush.msra.mxu0 0.0
  %48 = vmatpush.msra.mxu0 0.0
  %49 = vmatpush.msra.mxu0 %v30
  %50 = vmatmul.f32.gmra.mxu0 %v27
  %v51 = vpop.f32.mrf.mxu0
  %v52 = vadd.f32 0.0, %v51
  %53 = vdwg.mxu0
  %54 = vmatpush.msra.mxu0 0.0
  %55 = vmatpush.msra.mxu0 0.0
  %56 = vmatpush.msra.mxu0 0.0
  %57 = vmatpush.msra.mxu0 0.0
  %58 = vmatpush.msra.mxu0 0.0
  %59 = vmatpush.msra.mxu0 0.0
  %60 = vmatpush.msra.mxu0 0.0
  %61 = vmatpush.msra.mxu0 0.0
  %62 = vmatpush.msra.mxu0 0.0
  %63 = vmatpush.msra.mxu0 0.0
  %64 = vmatpush.msra.mxu0 0.0
  %65 = vmatpush.msra.mxu0 0.0
  %66 = vmatpush.msra.mxu0 0.0
  %67 = vmatpush.msra.mxu0 0.0
  %68 = vmatpush.msra.mxu0 0.0
  %69 = vmatpush.msra.mxu0 %v32
  %70 = vmatmul.f32.gmra.mxu0 %v27
  %v71 = vpop.f32.mrf.mxu0
  %v72 = vadd.f32 0.0, %v71
  %73 = vdwg.mxu0
  %75 = vset.pattern.permute.xlu0 0
  %76 = vperm.xlu0 %75, %v18
  %v77 = vpop.permute.xlu0 %76
  %v79 = vmul.f32 %v52, %v77
  %v80 = vmul.f32 %v72, %v77
  %82 = vset.pattern.permute.xlu0 0
  %83 = vperm.xlu0 %82, %v19
  %v84 = vpop.permute.xlu0 %83
  %v86 = vadd.f32 %v79, %v84
  %v87 = vadd.f32 %v80, %v84
  %88 = vst [vmem:[%s4] sm:$0xff] %v86
  %89 = vst [vmem:[%s4 + $0x8] sm:$0xff] %v87
  %s90 = scalar_lea.vmem %s0, 8
  %v91 = vld [vmem:[%s90] sm:$0xff]
  %93 = vst [vmem:[#allocation1] ss:$2 sm:$0xff] %v91
  %v94 = vld.sshfl [vmem:[#allocation1] sm:$0xff pattern:$0x75316420]
  %v95 = vld.sshfl [vmem:[#allocation1 + $0x8] sm:$0xff pattern:$0x75316420]
  %v96 = vsel %vm29, %v94, 0
  %v98 = vsel %vm29, %v95, 0
  %100 = vmatpush.msra.mxu0 0.0
  %101 = vmatpush.msra.mxu0 0.0
  %102 = vmatpush.msra.mxu0 0.0
  %103 = vmatpush.msra.mxu0 0.0
  %104 = vmatpush.msra.mxu0 0.0
  %105 = vmatpush.msra.mxu0 0.0
  %106 = vmatpush.msra.mxu0 0.0
  %107 = vmatpush.msra.mxu0 0.0
  %108 = vmatpush.msra.mxu0 0.0
  %109 = vmatpush.msra.mxu0 0.0
  %110 = vmatpush.msra.mxu0 0.0
  %111 = vmatpush.msra.mxu0 0.0
  %112 = vmatpush.msra.mxu0 0.0
  %113 = vmatpush.msra.mxu0 0.0
  %114 = vmatpush.msra.mxu0 0.0
  %115 = vmatpush.msra.mxu0 %v96
  %116 = vmatmul.f32.gmra.mxu0 %v27
  %v117 = vpop.f32.mrf.mxu0
  %v118 = vadd.f32 0.0, %v117
  %119 = vdwg.mxu0
  %120 = vmatpush.msra.mxu0 0.0
  %121 = vmatpush.msra.mxu0 0.0
  %122 = vmatpush.msra.mxu0 0.0
  %123 = vmatpush.msra.mxu0 0.0
  %124 = vmatpush.msra.mxu0 0.0
  %125 = vmatpush.msra.mxu0 0.0
  %126 = vmatpush.msra.mxu0 0.0
  %127 = vmatpush.msra.mxu0 0.0
  %128 = vmatpush.msra.mxu0 0.0
  %129 = vmatpush.msra.mxu0 0.0
  %130 = vmatpush.msra.mxu0 0.0
  %131 = vmatpush.msra.mxu0 0.0
  %132 = vmatpush.msra.mxu0 0.0
  %133 = vmatpush.msra.mxu0 0.0
  %134 = vmatpush.msra.mxu0 0.0
  %135 = vmatpush.msra.mxu0 %v98
  %136 = vmatmul.f32.gmra.mxu0 %v27
  %v137 = vpop.f32.mrf.mxu0
  %v138 = vadd.f32 0.0, %v137
  %139 = vdwg.mxu0
  %v140 = vmul.f32 %v118, %v77
  %v141 = vmul.f32 %v138, %v77
  %v142 = vadd.f32 %v140, %v84
  %v143 = vadd.f32 %v141, %v84
  %s144 = scalar_lea.vmem %s4, 16
  %145 = vst [vmem:[%s144] sm:$0xff] %v142
  %146 = vst [vmem:[%s144 + $0x8] sm:$0xff] %v143
  // Predicated region
  $region18: #{conv_bn_forward.3} parent=0 // pred_check
    _
  $region19: #{conv_bn_forward.3} parent=0 // pred_check_branch
    %148 = sbr.rel (0) target = $region21
  $region20: #{conv_bn_forward.3} parent=0 // pred_region
    _
  $region21: #{conv_bn_forward.3} parent=0 // pred_fallthru
    _
  // Predicated region
  $region22: #{conv_bn_forward.3} parent=0 // pred_check
    _
  $region23: #{conv_bn_forward.3} parent=0 // pred_check_branch
    %150 = sbr.rel (0) target = $region25
  $region24: #{conv_bn_forward.3} parent=0 // pred_region
    _
  $region25: #{conv_bn_forward.3} parent=0 // pred_fallthru
    _

</llo_original>
